<compile_context>
chip_gen: v7x
topology: tpu7x:2x2x1
jax: 0.10.0
libtpu: 0.0.40
codegen_flags: <defaults>
</compile_context>

<pallas_src>
import jax
import jax.numpy as jnp
import numpy as np
from jax.experimental import pallas as pl


def _round_up(n, m):
    return ((n + m - 1) // m) * m


# ------------------------------ Pallas kernels -------------------------------
def _dueling_mlp_noisy_kernel(
    x_ref,
    mu_wt1_ref, sig_wt1_ref, mu_b1_ref, sig_b1_ref, eps_p1_ref, eps_q1_ref,
    mu_wt2_ref, sig_wt2_ref, mu_b2_ref, sig_b2_ref, eps_p2_ref, eps_q2_ref,
    o_ref,
):
    """out = ReLU(x @ W1.T + b1) @ W2.T + b2 with factored-noise weights.

    Shapes (all resident in VMEM, weights pre-transposed to [in, out]):
      x_ref [B,in1], mu_wt1/sig_wt1 [in1,out1], mu_b1/sig_b1/eps_q1 [1,out1],
      eps_p1 [in1,1]; layer-2 analogously with in2=out1; o_ref [B,out2_pad].
    """
    # ---- layer 1: noisy weight construction (f32 VPU), bf16 MXU matmul ------
    w1_t = mu_wt1_ref[...] + sig_wt1_ref[...] * (eps_p1_ref[...] * eps_q1_ref[...])
    b1 = mu_b1_ref[...] + sig_b1_ref[...] * eps_q1_ref[...]
    h = jnp.dot(x_ref[...].astype(jnp.bfloat16), w1_t.astype(jnp.bfloat16),
                preferred_element_type=jnp.float32) + b1
    h = jnp.maximum(h, 0.0)                     # ReLU; stays on-chip

    # ---- layer 2 -------------------------------------------------------------
    w2_t = mu_wt2_ref[...] + sig_wt2_ref[...] * (eps_p2_ref[...] * eps_q2_ref[...])
    b2 = mu_b2_ref[...] + sig_b2_ref[...] * eps_q2_ref[...]
    y = jnp.dot(h.astype(jnp.bfloat16), w2_t.astype(jnp.bfloat16),
                preferred_element_type=jnp.float32) + b2
    o_ref[...] = y.astype(o_ref.dtype)


def _dueling_mlp_plain_kernel(x_ref, mu_wt1_ref, mu_b1_ref,
                              mu_wt2_ref, mu_b2_ref, o_ref):
    """noise_mode=False: y = ReLU(x @ mu_W1.T + mu_b1) @ mu_W2.T + mu_b2."""
    h = jnp.dot(x_ref[...].astype(jnp.bfloat16),
                mu_wt1_ref[...].astype(jnp.bfloat16),
                preferred_element_type=jnp.float32) + mu_b1_ref[...]
    h = jnp.maximum(h, 0.0)
    y = jnp.dot(h.astype(jnp.bfloat16),
                mu_wt2_ref[...].astype(jnp.bfloat16),
                preferred_element_type=jnp.float32) + mu_b2_ref[...]
    o_ref[...] = y.astype(o_ref.dtype)


# --------------------------------- wrapper ------------------------------------
def dueling_mlp_forward(x, layer1, layer2, n_out, *, noise_mode=True):
    """DuelingMLP.forward: flatten(extractor(x)) -> ReLU(NoisyLin) -> NoisyLin."""
    # TODO(synk): `extractor` is an arbitrary injected nn.Module in PyTorch;
    # identity/flatten is used here since no concrete extractor is specified.
    feats = x.reshape(x.shape[0], -1)
    b = feats.shape[0]
    out_pad = layer2["mu_W_t"].shape[1]         # lane-padded output width

    if noise_mode:
        inputs = (feats,
                  layer1["mu_W_t"], layer1["sigma_W_t"], layer1["mu_bias"],
                  layer1["sigma_bias"], layer1["eps_p"], layer1["eps_q"],
                  layer2["mu_W_t"], layer2["sigma_W_t"], layer2["mu_bias"],
                  layer2["sigma_bias"], layer2["eps_p"], layer2["eps_q"])
        kernel = _dueling_mlp_noisy_kernel
    else:
        inputs = (feats, layer1["mu_W_t"], layer1["mu_bias"],
                  layer2["mu_W_t"], layer2["mu_bias"])
        kernel = _dueling_mlp_plain_kernel

    # All tensors are 2-D and consumed whole (gridless call, full-array blocks).
    in_specs = [pl.BlockSpec(a.shape, lambda: (0, 0)) for a in inputs]
    out_spec = pl.BlockSpec((b, out_pad), lambda: (0, 0))

    out_padded = pl.pallas_call(
        kernel,
        out_shape=jax.ShapeDtypeStruct((b, out_pad), jnp.float32),
        in_specs=in_specs,
        out_specs=out_spec,
    )(*inputs)
    return out_padded[:, :n_out]


# ------------------------ deterministic parameter init ------------------------
def _f_noise(key, shape):
    """PyTorch NoisyLinear._f:  sign(n) * sqrt(|n|),  n ~ N(0, 1)."""
    n = jax.random.normal(key, shape, dtype=jnp.float32)
    return jnp.sign(n) * jnp.sqrt(jnp.abs(n))


def init_noisy_linear(key, in_features, out_features, sigma=0.5, *, out_pad=None):
    """NoisyLinear.reset_param()+reset_noise(), stored kernel-ready:
    weights pre-transposed to [in, out(_pad)], biases/eps 2-D, output feature
    dim zero-padded to `out_pad` lanes. Raw PyTorch-layout copies kept for the
    reference implementation."""
    if out_pad is None:
        out_pad = out_features
    k_w, k_b, k_p, k_q = jax.random.split(key, 4)
    bound = 1.0 / np.sqrt(in_features)
    mu_W = jax.random.uniform(k_w, (out_features, in_features), jnp.float32,
                              -bound, bound)
    sigma_W = jnp.full((out_features, in_features),
                       sigma / np.sqrt(in_features), jnp.float32)
    mu_b = jax.random.uniform(k_b, (out_features,), jnp.float32, -bound, bound)
    sigma_b = jnp.full((out_features,), sigma / np.sqrt(out_features), jnp.float32)
    eps_p = _f_noise(k_p, (in_features,))
    eps_q = _f_noise(k_q, (out_features,))

    pad = out_pad - out_features

    def pad_wt(w):                      # [out,in] -> [in,out_pad]
        w_t = w.T
        return jnp.pad(w_t, ((0, 0), (0, pad))) if pad else w_t

    def pad_row(v):                     # [out] -> [1,out_pad]
        v2 = v.reshape(1, out_features)
        return jnp.pad(v2, ((0, 0), (0, pad))) if pad else v2

    return {
        "mu_W_t": pad_wt(mu_W),
        "sigma_W_t": pad_wt(sigma_W),
        "mu_bias": pad_row(mu_b),
        "sigma_bias": pad_row(sigma_b),
        "eps_p": eps_p.reshape(in_features, 1),
        "eps_q": pad_row(eps_q),
        "_raw": {"mu_W": mu_W, "sigma_W": sigma_W, "mu_bias": mu_b,
                 "sigma_bias": sigma_b, "eps_p": eps_p, "eps_q": eps_q},
    }


# --------------------------------- reference ----------------------------------
def _reference_noisy_linear(x, raw, apply_relu, noise_mode=True):
    if noise_mode:
        w = raw["mu_W"] + raw["sigma_W"] * jnp.outer(raw["eps_q"], raw["eps_p"])
        b = raw["mu_bias"] + raw["sigma_bias"] * raw["eps_q"]
    else:
        w, b = raw["mu_W"], raw["mu_bias"]
    y = x @ w.T + b
    return jnp.maximum(y, 0.0) if apply_relu else y


if __name__ == "__main__":
    key = jax.random.PRNGKey(0)
    k_x, k_l1, k_l2 = jax.random.split(key, 3)

    batch, c, hgt, wid = 2, 4, 4, 4           # extractor = identity + flatten
    in_dim = c * hgt * wid                    # extractor.units = 64
    hidden = 320                              # DuelingMLP hidden width (spec)
    n_out = 8
    out_pad = _round_up(n_out, 128)           # lane-dense kernel output (128)

    x = jax.random.normal(k_x, (batch, c, hgt, wid), dtype=jnp.float32)
    layer1 = init_noisy_linear(k_l1, in_dim, hidden)
    layer2 = init_noisy_linear(k_l2, hidden, n_out, out_pad=out_pad)

    feats = x.reshape(batch, -1)

    # --- noisy path (NoisyLinear default: _noise_mode=True) -------------------
    out = dueling_mlp_forward(x, layer1, layer2, n_out, noise_mode=True)
    out = jax.block_until_ready(out)
    ref_h = _reference_noisy_linear(feats, layer1["_raw"], True, True)
    ref = _reference_noisy_linear(ref_h, layer2["_raw"], False, True)
    # bf16 MXU operands -> tolerance relaxed vs. the f32 reference.
    np.testing.assert_allclose(np.asarray(out), np.asarray(ref),
                               rtol=2e-2, atol=2e-2)

    # --- no-noise path (static variant; sigma/eps never touched) --------------
    out_nn = dueling_mlp_forward(x, layer1, layer2, n_out, noise_mode=False)
    out_nn = jax.block_until_ready(out_nn)
    ref_h_nn = _reference_noisy_linear(feats, layer1["_raw"], True, False)
    ref_nn = _reference_noisy_linear(ref_h_nn, layer2["_raw"], False, False)
    np.testing.assert_allclose(np.asarray(out_nn), np.asarray(ref_nn),
                               rtol=2e-2, atol=2e-2)

    assert out.shape == (batch, n_out)
    print("KERNEL_OK")
</pallas_src>

<mosaic_0001>
module attributes {stable_mosaic.version = 11 : i64} {
  func.func @_dueling_mlp_noisy_kernel(%arg0: memref<2x64xf32, #tpu.memory_space<vmem>>, %arg1: memref<64x320xf32, #tpu.memory_space<vmem>>, %arg2: memref<64x320xf32, #tpu.memory_space<vmem>>, %arg3: memref<1x320xf32, #tpu.memory_space<vmem>>, %arg4: memref<1x320xf32, #tpu.memory_space<vmem>>, %arg5: memref<64x1xf32, #tpu.memory_space<vmem>>, %arg6: memref<1x320xf32, #tpu.memory_space<vmem>>, %arg7: memref<320x128xf32, #tpu.memory_space<vmem>>, %arg8: memref<320x128xf32, #tpu.memory_space<vmem>>, %arg9: memref<1x128xf32, #tpu.memory_space<vmem>>, %arg10: memref<1x128xf32, #tpu.memory_space<vmem>>, %arg11: memref<320x1xf32, #tpu.memory_space<vmem>>, %arg12: memref<1x128xf32, #tpu.memory_space<vmem>>, %arg13: memref<2x128xf32, #tpu.memory_space<vmem>>) attributes {dimension_semantics = [], scalar_prefetch = 0 : i64, scratch_operands = 0 : i64, tpu.core_type = #tpu.core_type<tc>} {
    %c0 = arith.constant 0 : index
    %c0_0 = arith.constant 0 : index
    %0 = vector.load %arg1[%c0, %c0_0] : memref<64x320xf32, #tpu.memory_space<vmem>>, vector<64x320xf32>
    %c0_1 = arith.constant 0 : index
    %c0_2 = arith.constant 0 : index
    %1 = vector.load %arg2[%c0_1, %c0_2] : memref<64x320xf32, #tpu.memory_space<vmem>>, vector<64x320xf32>
    %c0_3 = arith.constant 0 : index
    %c0_4 = arith.constant 0 : index
    %2 = vector.load %arg5[%c0_3, %c0_4] : memref<64x1xf32, #tpu.memory_space<vmem>>, vector<64x1xf32>
    %c0_5 = arith.constant 0 : index
    %c0_6 = arith.constant 0 : index
    %3 = vector.load %arg6[%c0_5, %c0_6] : memref<1x320xf32, #tpu.memory_space<vmem>>, vector<1x320xf32>
    %4 = vector.broadcast %2 : vector<64x1xf32> to vector<64x320xf32>
    %5 = vector.broadcast %3 : vector<1x320xf32> to vector<64x320xf32>
    %6 = arith.mulf %4, %5 : vector<64x320xf32>
    %7 = arith.mulf %1, %6 : vector<64x320xf32>
    %8 = arith.addf %0, %7 : vector<64x320xf32>
    %c0_7 = arith.constant 0 : index
    %c0_8 = arith.constant 0 : index
    %9 = vector.load %arg3[%c0_7, %c0_8] : memref<1x320xf32, #tpu.memory_space<vmem>>, vector<1x320xf32>
    %c0_9 = arith.constant 0 : index
    %c0_10 = arith.constant 0 : index
    %10 = vector.load %arg4[%c0_9, %c0_10] : memref<1x320xf32, #tpu.memory_space<vmem>>, vector<1x320xf32>
    %c0_11 = arith.constant 0 : index
    %c0_12 = arith.constant 0 : index
    %11 = vector.load %arg6[%c0_11, %c0_12] : memref<1x320xf32, #tpu.memory_space<vmem>>, vector<1x320xf32>
    %12 = arith.mulf %10, %11 : vector<1x320xf32>
    %13 = arith.addf %9, %12 : vector<1x320xf32>
    %c0_13 = arith.constant 0 : index
    %c0_14 = arith.constant 0 : index
    %14 = vector.load %arg0[%c0_13, %c0_14] : memref<2x64xf32, #tpu.memory_space<vmem>>, vector<2x64xf32>
    %15 = arith.truncf %14 : vector<2x64xf32> to vector<2x64xbf16>
    %16 = arith.truncf %8 : vector<64x320xf32> to vector<64x320xbf16>
    %cst = arith.constant dense<0.000000e+00> : vector<2x320xf32>
    %17 = tpu.matmul %15, %16, %cst {dimension_numbers = #tpu.dot_dimension_numbers<[1], [0], [0], [1], [0, 0, 1, 1], [], []>} : vector<2x64xbf16>, vector<64x320xbf16>, vector<2x320xf32> -> vector<2x320xf32>
    %18 = vector.broadcast %13 : vector<1x320xf32> to vector<2x320xf32>
    %19 = arith.addf %17, %18 : vector<2x320xf32>
    %cst_15 = arith.constant 0.000000e+00 : f32
    %20 = vector.broadcast %cst_15 : f32 to vector<2x320xf32>
    %21 = arith.maximumf %19, %20 : vector<2x320xf32>
    %c0_16 = arith.constant 0 : index
    %c0_17 = arith.constant 0 : index
    %22 = vector.load %arg7[%c0_16, %c0_17] : memref<320x128xf32, #tpu.memory_space<vmem>>, vector<320x128xf32>
    %c0_18 = arith.constant 0 : index
    %c0_19 = arith.constant 0 : index
    %23 = vector.load %arg8[%c0_18, %c0_19] : memref<320x128xf32, #tpu.memory_space<vmem>>, vector<320x128xf32>
    %c0_20 = arith.constant 0 : index
    %c0_21 = arith.constant 0 : index
    %24 = vector.load %arg11[%c0_20, %c0_21] : memref<320x1xf32, #tpu.memory_space<vmem>>, vector<320x1xf32>
    %c0_22 = arith.constant 0 : index
    %c0_23 = arith.constant 0 : index
    %25 = vector.load %arg12[%c0_22, %c0_23] : memref<1x128xf32, #tpu.memory_space<vmem>>, vector<1x128xf32>
    %26 = vector.broadcast %24 : vector<320x1xf32> to vector<320x128xf32>
    %27 = vector.broadcast %25 : vector<1x128xf32> to vector<320x128xf32>
    %28 = arith.mulf %26, %27 : vector<320x128xf32>
    %29 = arith.mulf %23, %28 : vector<320x128xf32>
    %30 = arith.addf %22, %29 : vector<320x128xf32>
    %c0_24 = arith.constant 0 : index
    %c0_25 = arith.constant 0 : index
    %31 = vector.load %arg9[%c0_24, %c0_25] : memref<1x128xf32, #tpu.memory_space<vmem>>, vector<1x128xf32>
    %c0_26 = arith.constant 0 : index
    %c0_27 = arith.constant 0 : index
    %32 = vector.load %arg10[%c0_26, %c0_27] : memref<1x128xf32, #tpu.memory_space<vmem>>, vector<1x128xf32>
    %c0_28 = arith.constant 0 : index
    %c0_29 = arith.constant 0 : index
    %33 = vector.load %arg12[%c0_28, %c0_29] : memref<1x128xf32, #tpu.memory_space<vmem>>, vector<1x128xf32>
    %34 = arith.mulf %32, %33 : vector<1x128xf32>
    %35 = arith.addf %31, %34 : vector<1x128xf32>
    %36 = arith.truncf %21 : vector<2x320xf32> to vector<2x320xbf16>
    %37 = arith.truncf %30 : vector<320x128xf32> to vector<320x128xbf16>
    %cst_30 = arith.constant dense<0.000000e+00> : vector<2x128xf32>
    %38 = tpu.matmul %36, %37, %cst_30 {dimension_numbers = #tpu.dot_dimension_numbers<[1], [0], [0], [1], [0, 0, 1, 1], [], []>} : vector<2x320xbf16>, vector<320x128xbf16>, vector<2x128xf32> -> vector<2x128xf32>
    %39 = vector.broadcast %35 : vector<1x128xf32> to vector<2x128xf32>
    %40 = arith.addf %38, %39 : vector<2x128xf32>
    %c0_31 = arith.constant 0 : index
    %c0_32 = arith.constant 0 : index
    %41 = vector.load %arg13[%c0_31, %c0_32] : memref<2x128xf32, #tpu.memory_space<vmem>>, vector<2x128xf32>
    tpu.vector_store %arg13[%c0_31, %c0_32], %40 {strides = array<i32>} : memref<2x128xf32, #tpu.memory_space<vmem>>, vector<2x128xf32>,
    return
  }
}

</mosaic_0001>

<llo_original>
// kernel: tpu_custom_call.1
$region0: #{tpu_custom_call.1}
  #allocation0 [shape = 'u32[]', space=smem, size = 0x4, offset = 0x4, fixed_abs, tag = 'smem constant byte address 0x4 - core index']
  #allocation1 [shape = 'u32[144,128]{1,0:T(1,128)}', space=vmem, size = 0x12000, scoped, tag = 'internal scratch']
  %s0 = inlined_call_operand.vmem [shape: f32[2,64], index: 0, kind: input, shape index: {}]
  %s1 = inlined_call_operand.hbm [shape: f32[64,320], index: 1, kind: input, shape index: {}]
  %s2 = inlined_call_operand.hbm [shape: f32[64,320], index: 2, kind: input, shape index: {}]
  %s3 = inlined_call_operand.vmem [shape: f32[1,320], index: 3, kind: input, shape index: {}]
  %s4 = inlined_call_operand.vmem [shape: f32[1,320], index: 4, kind: input, shape index: {}]
  %s5 = inlined_call_operand.vmem [shape: f32[64,1], index: 5, kind: input, shape index: {}]
  %s6 = inlined_call_operand.vmem [shape: f32[1,320], index: 6, kind: input, shape index: {}]
  %s7 = inlined_call_operand.vmem [shape: f32[320,128], index: 7, kind: input, shape index: {}]
  %s8 = inlined_call_operand.hbm [shape: f32[320,128], index: 8, kind: input, shape index: {}]
  %s9 = inlined_call_operand.vmem [shape: f32[1,128], index: 9, kind: input, shape index: {}]
  %s10 = inlined_call_operand.vmem [shape: f32[1,128], index: 10, kind: input, shape index: {}]
  %s11 = inlined_call_operand.vmem [shape: f32[320,1], index: 11, kind: input, shape index: {}]
  %s12 = inlined_call_operand.vmem [shape: f32[1,128], index: 12, kind: input, shape index: {}]
  %s13 = inlined_call_operand.hbm [shape: f32[2,128], index: 13, kind: output, shape index: {}]
  %s14 = sld [smem:[#allocation0]]
  $region74: #{tpu_custom_call.1} parent=0
    _
  %s16 = ssub.s32 1, %s14
  %s17 = scalar_select 0, %s16, %s14
  $region1: #{tpu_custom_call.1} parent=0
    #allocation2 [shape = 'u8[98304]{0}', space=vmem, size = 0x18000, scoped, tag = 'input window, operand 1, single buffered']
    #allocation3 [shape = 's32[1]{0}', space=sflag, size = 0x4, scoped, tag = 'scoped memory for tpu_custom_call.1']
    #allocation4 [shape = 's32[1]{0}', space=sflag, size = 0x4, scoped, tag = 'scoped memory for tpu_custom_call.1']
    #allocation5 [shape = 'u8[98304]{0}', space=vmem, size = 0x18000, scoped, tag = 'input window, operand 2, single buffered']
    #allocation6 [shape = 's32[1]{0}', space=sflag, size = 0x4, scoped, tag = 'scoped memory for tpu_custom_call.1']
    #allocation7 [shape = 'u8[163840]{0}', space=vmem, size = 0x28000, scoped, tag = 'input window, operand 8, single buffered']
    #allocation8 [shape = 'u8[1024]{0}', space=vmem, size = 0x400, scoped, tag = 'output window, operand 0, single buffered']
    %18 = vsyncpa [#allocation3], 0
    %19 = vsyncpa [#allocation6], 0
    %20 = vsyncpa [#allocation4], 0
    // Predicated region
    $region2: #{tpu_custom_call.1} parent=1 // pred_check
      _
    $region3: #{tpu_custom_call.1} parent=1 // pred_check_branch
      %22 = sbr.rel (0) target = $region5
    $region4: #{tpu_custom_call.1} parent=1 // pred_region
      _
    $region5: #{tpu_custom_call.1} parent=1 // pred_fallthru
      _
    // Predicated region
    $region6: #{tpu_custom_call.1} parent=1 // pred_check
      _
    $region7: #{tpu_custom_call.1} parent=1 // pred_check_branch
      %24 = sbr.rel (0) target = $region9
    $region8: #{tpu_custom_call.1} parent=1 // pred_region
      %s26 = ssub.s32 3072, 3072
      %27 = vsyncadd [#allocation3], %s26
      %s28 = sshll.u32 [#allocation2], 4
      %s29 = int_to_ptr.vmem [resolvable:$true] %s28
      %34 = dma.hbm_to_vmem [thread:$0]  %s1, 3072, %s29, [#allocation3], 384, 384, 24
    $region9: #{tpu_custom_call.1} parent=1 // pred_fallthru
      _
    // Predicated region
    $region10: #{tpu_custom_call.1} parent=1 // pred_check
      _
    $region11: #{tpu_custom_call.1} parent=1 // pred_check_branch
      %36 = sbr.rel (0) target = $region13
    $region12: #{tpu_custom_call.1} parent=1 // pred_region
      %s38 = ssub.s32 3072, 3072
      %39 = vsyncadd [#allocation6], %s38
      %s40 = sshll.u32 [#allocation5], 4
      %s41 = int_to_ptr.vmem [resolvable:$true] %s40
      %46 = dma.hbm_to_vmem [thread:$0]  %s2, 3072, %s41, [#allocation6], 384, 384, 24
    $region13: #{tpu_custom_call.1} parent=1 // pred_fallthru
      _
    // Predicated region
    $region14: #{tpu_custom_call.1} parent=1 // pred_check
      _
    $region15: #{tpu_custom_call.1} parent=1 // pred_check_branch
      %48 = sbr.rel (0) target = $region17
    $region16: #{tpu_custom_call.1} parent=1 // pred_region
      _
    $region17: #{tpu_custom_call.1} parent=1 // pred_fallthru
      _
    // Predicated region
    $region18: #{tpu_custom_call.1} parent=1 // pred_check
      _
    $region19: #{tpu_custom_call.1} parent=1 // pred_check_branch
      %50 = sbr.rel (0) target = $region21
    $region20: #{tpu_custom_call.1} parent=1 // pred_region
      _
    $region21: #{tpu_custom_call.1} parent=1 // pred_fallthru
      _
    // Predicated region
    $region22: #{tpu_custom_call.1} parent=1 // pred_check
      _
    $region23: #{tpu_custom_call.1} parent=1 // pred_check_branch
      %52 = sbr.rel (0) target = $region25
    $region24: #{tpu_custom_call.1} parent=1 // pred_region
      _
    $region25: #{tpu_custom_call.1} parent=1 // pred_fallthru
      _
    // Predicated region
    $region26: #{tpu_custom_call.1} parent=1 // pred_check
      _
    $region27: #{tpu_custom_call.1} parent=1 // pred_check_branch
      %54 = sbr.rel (0) target = $region29
    $region28: #{tpu_custom_call.1} parent=1 // pred_region
      _
    $region29: #{tpu_custom_call.1} parent=1 // pred_fallthru
      _
    // Predicated region
    $region30: #{tpu_custom_call.1} parent=1 // pred_check
      _
    $region31: #{tpu_custom_call.1} parent=1 // pred_check_branch
      %56 = sbr.rel (0) target = $region33
    $region32: #{tpu_custom_call.1} parent=1 // pred_region
      _
    $region33: #{tpu_custom_call.1} parent=1 // pred_fallthru
      _
    // Predicated region
    $region34: #{tpu_custom_call.1} parent=1 // pred_check
      _
    $region35: #{tpu_custom_call.1} parent=1 // pred_check_branch
      %58 = sbr.rel (0) target = $region37
    $region36: #{tpu_custom_call.1} parent=1 // pred_region
      %s60 = ssub.s32 5120, 5120
      %61 = vsyncadd [#allocation6], %s60
      %s62 = sshll.u32 [#allocation7], 4
      %s63 = int_to_ptr.vmem [resolvable:$true] %s62
      %68 = dma.hbm_to_vmem [thread:$0]  %s8, 5120, %s63, [#allocation6], 128, 128, 8
    $region37: #{tpu_custom_call.1} parent=1 // pred_fallthru
      _
    // Predicated region
    $region38: #{tpu_custom_call.1} parent=1 // pred_check
      _
    $region39: #{tpu_custom_call.1} parent=1 // pred_check_branch
      %70 = sbr.rel (0) target = $region41
    $region40: #{tpu_custom_call.1} parent=1 // pred_region
      _
    $region41: #{tpu_custom_call.1} parent=1 // pred_fallthru
      _
    // Predicated region
    $region42: #{tpu_custom_call.1} parent=1 // pred_check
      _
    $region43: #{tpu_custom_call.1} parent=1 // pred_check_branch
      %72 = sbr.rel (0) target = $region45
    $region44: #{tpu_custom_call.1} parent=1 // pred_region
      _
    $region45: #{tpu_custom_call.1} parent=1 // pred_fallthru
      _
    // Predicated region
    $region46: #{tpu_custom_call.1} parent=1 // pred_check
      _
    $region47: #{tpu_custom_call.1} parent=1 // pred_check_branch
      %74 = sbr.rel (0) target = $region49
    $region48: #{tpu_custom_call.1} parent=1 // pred_region
      _
    $region49: #{tpu_custom_call.1} parent=1 // pred_fallthru
      _
    // Predicated region
    $region50: #{tpu_custom_call.1} parent=1 // pred_check
      _
    $region51: #{tpu_custom_call.1} parent=1 // pred_check_branch
      %76 = sbr.rel (0) target = $region53
    $region52: #{tpu_custom_call.1} parent=1 // pred_region
      _
    $region53: #{tpu_custom_call.1} parent=1 // pred_fallthru
      _
    // Predicated region
    $region54: #{tpu_custom_call.1} parent=1 // pred_check
      _
    $region55: #{tpu_custom_call.1} parent=1 // pred_check_branch
      %78 = sbr.rel (0) target = $region57
    $region56: #{tpu_custom_call.1} parent=1 // pred_region
      %79 = dma.done [#allocation3], 3072
    $region57: #{tpu_custom_call.1} parent=1 // pred_fallthru
      _
    // Predicated region
    $region58: #{tpu_custom_call.1} parent=1 // pred_check
      _
    $region59: #{tpu_custom_call.1} parent=1 // pred_check_branch
      %81 = sbr.rel (0) target = $region61
    $region60: #{tpu_custom_call.1} parent=1 // pred_region
      %82 = dma.done [#allocation6], 3072
    $region61: #{tpu_custom_call.1} parent=1 // pred_fallthru
      _
    // Predicated region
    $region62: #{tpu_custom_call.1} parent=1 // pred_check
      _
    $region63: #{tpu_custom_call.1} parent=1 // pred_check_branch
      %84 = sbr.rel (0) target = $region65
    $region64: #{tpu_custom_call.1} parent=1 // pred_region
      %85 = dma.done [#allocation6], 5120
    $region65: #{tpu_custom_call.1} parent=1 // pred_fallthru
      _
    %v87 = vld [vmem:[#allocation2] sm:$0xff]
    %v88 = vld [vmem:[#allocation2 + $0x8] sm:$0xff]
    %v89 = vld [vmem:[#allocation2 + $0x10] sm:$0xff]
    %v90 = vld [vmem:[#allocation2 + $0x18] sm:$0xff]
    %v91 = vld [vmem:[#allocation2 + $0x20] sm:$0xff]
    %v92 = vld [vmem:[#allocation2 + $0x28] sm:$0xff]
    %v93 = vld [vmem:[#allocation2 + $0x30] sm:$0xff]
    %v94 = vld [vmem:[#allocation2 + $0x38] sm:$0xff]
    %v95 = vld [vmem:[#allocation2 + $0x40] sm:$0xff]
    %v96 = vld [vmem:[#allocation2 + $0x48] sm:$0xff]
    %v97 = vld [vmem:[#allocation2 + $0x50] sm:$0xff]
    %v98 = vld [vmem:[#allocation2 + $0x58] sm:$0xff]
    %v99 = vld [vmem:[#allocation2 + $0x60] sm:$0xff]
    %v100 = vld [vmem:[#allocation2 + $0x68] sm:$0xff]
    %v101 = vld [vmem:[#allocation2 + $0x70] sm:$0xff]
    %v102 = vld [vmem:[#allocation2 + $0x78] sm:$0xff]
    %v103 = vld [vmem:[#allocation2 + $0x80] sm:$0xff]
    %v104 = vld [vmem:[#allocation2 + $0x88] sm:$0xff]
    %v105 = vld [vmem:[#allocation2 + $0x90] sm:$0xff]
    %v106 = vld [vmem:[#allocation2 + $0x98] sm:$0xff]
    %v107 = vld [vmem:[#allocation2 + $0xa0] sm:$0xff]
    %v108 = vld [vmem:[#allocation2 + $0xa8] sm:$0xff]
    %v109 = vld [vmem:[#allocation2 + $0xb0] sm:$0xff]
    %v110 = vld [vmem:[#allocation2 + $0xb8] sm:$0xff]
    %v111 = vld [vmem:[#allocation5] sm:$0xff]
    %v112 = vld [vmem:[#allocation5 + $0x8] sm:$0xff]
    %v113 = vld [vmem:[#allocation5 + $0x10] sm:$0xff]
    %v114 = vld [vmem:[#allocation5 + $0x18] sm:$0xff]
    %v115 = vld [vmem:[#allocation5 + $0x20] sm:$0xff]
    %v116 = vld [vmem:[#allocation5 + $0x28] sm:$0xff]
    %v117 = vld [vmem:[#allocation5 + $0x30] sm:$0xff]
    %v118 = vld [vmem:[#allocation5 + $0x38] sm:$0xff]
    %v119 = vld [vmem:[#allocation5 + $0x40] sm:$0xff]
    %v120 = vld [vmem:[#allocation5 + $0x48] sm:$0xff]
    %v121 = vld [vmem:[#allocation5 + $0x50] sm:$0xff]
    %v122 = vld [vmem:[#allocation5 + $0x58] sm:$0xff]
    %v123 = vld [vmem:[#allocation5 + $0x60] sm:$0xff]
    %v124 = vld [vmem:[#allocation5 + $0x68] sm:$0xff]
    %v125 = vld [vmem:[#allocation5 + $0x70] sm:$0xff]
    %v126 = vld [vmem:[#allocation5 + $0x78] sm:$0xff]
    %v127 = vld [vmem:[#allocation5 + $0x80] sm:$0xff]
    %v128 = vld [vmem:[#allocation5 + $0x88] sm:$0xff]
    %v129 = vld [vmem:[#allocation5 + $0x90] sm:$0xff]
    %v130 = vld [vmem:[#allocation5 + $0x98] sm:$0xff]
    %v131 = vld [vmem:[#allocation5 + $0xa0] sm:$0xff]
    %v132 = vld [vmem:[#allocation5 + $0xa8] sm:$0xff]
    %v133 = vld [vmem:[#allocation5 + $0xb0] sm:$0xff]
    %v134 = vld [vmem:[#allocation5 + $0xb8] sm:$0xff]
    %v135 = vld [vmem:[%s5] sm:$0xff]
    %v136 = vld [vmem:[%s5 + $0x8] sm:$0xff]
    %v137 = vld [vmem:[%s5 + $0x10] sm:$0xff]
    %v138 = vld [vmem:[%s5 + $0x18] sm:$0xff]
    %v139 = vld [vmem:[%s5 + $0x20] sm:$0xff]
    %v140 = vld [vmem:[%s5 + $0x28] sm:$0xff]
    %v141 = vld [vmem:[%s5 + $0x30] sm:$0xff]
    %v142 = vld [vmem:[%s5 + $0x38] sm:$0xff]
    %v143 = vld [vmem:[%s6] sm:$0x7]
    %145 = vset.pattern.permute.xlu0 0
    %146 = vperm.xlu0 %145, %v135
    %v147 = vpop.permute.xlu0 %146
    %150 = vset.pattern.permute.xlu0 0
    %151 = vperm.xlu0 %150, %v136
    %v152 = vpop.permute.xlu0 %151
    %155 = vset.pattern.permute.xlu0 0
    %156 = vperm.xlu0 %155, %v137
    %v157 = vpop.permute.xlu0 %156
    %160 = vset.pattern.permute.xlu0 0
    %161 = vperm.xlu0 %160, %v138
    %v162 = vpop.permute.xlu0 %161
    %165 = vset.pattern.permute.xlu0 0
    %166 = vperm.xlu0 %165, %v139
    %v167 = vpop.permute.xlu0 %166
    %170 = vset.pattern.permute.xlu0 0
    %171 = vperm.xlu0 %170, %v140
    %v172 = vpop.permute.xlu0 %171
    %175 = vset.pattern.permute.xlu0 0
    %176 = vperm.xlu0 %175, %v141
    %v177 = vpop.permute.xlu0 %176
    %180 = vset.pattern.permute.xlu0 0
    %181 = vperm.xlu0 %180, %v142
    %v182 = vpop.permute.xlu0 %181
    %v185 = vlaneseq
    %v186 = vshrl.u32 %v185, 7
    %v187 = vsub.s32 0, %v186
    %v188 = vrot.slane %v143, %v187
    %v189 = vlaneseq
    %v190 = vshrl.u32 %v189, 7
    %v191 = vsub.s32 1, %v190
    %v192 = vrot.slane %v143, %v191
    %v193 = vlaneseq
    %v194 = vshrl.u32 %v193, 7
    %v195 = vsub.s32 2, %v194
    %v196 = vrot.slane %v143, %v195
    %v200 = vmul.f32 %v147, %v188
    %v201 = vmul.f32 %v147, %v192
    %v202 = vmul.f32 %v147, %v196
    %v203 = vmul.f32 %v152, %v188
    %v204 = vmul.f32 %v152, %v192
    %v205 = vmul.f32 %v152, %v196
    %v206 = vmul.f32 %v157, %v188
    %v207 = vmul.f32 %v157, %v192
    %v208 = vmul.f32 %v157, %v196
    %v209 = vmul.f32 %v162, %v188
    %v210 = vmul.f32 %v162, %v192
    %v211 = vmul.f32 %v162, %v196
    %v212 = vmul.f32 %v167, %v188
    %v213 = vmul.f32 %v167, %v192
    %v214 = vmul.f32 %v167, %v196
    %v215 = vmul.f32 %v172, %v188
    %v216 = vmul.f32 %v172, %v192
    %v217 = vmul.f32 %v172, %v196
    %v218 = vmul.f32 %v177, %v188
    %v219 = vmul.f32 %v177, %v192
    %v220 = vmul.f32 %v177, %v196
    %v221 = vmul.f32 %v182, %v188
    %v222 = vmul.f32 %v182, %v192
    %v223 = vmul.f32 %v182, %v196
    %v224 = vmul.f32 %v111, %v200
    %v225 = vmul.f32 %v112, %v201
    %v226 = vmul.f32 %v113, %v202
    %v227 = vmul.f32 %v114, %v203
    %v228 = vmul.f32 %v115, %v204
    %v229 = vmul.f32 %v116, %v205
    %v230 = vmul.f32 %v117, %v206
    %v231 = vmul.f32 %v118, %v207
    %v232 = vmul.f32 %v119, %v208
    %v233 = vmul.f32 %v120, %v209
    %v234 = vmul.f32 %v121, %v210
    %v235 = vmul.f32 %v122, %v211
    %v236 = vmul.f32 %v123, %v212
    %v237 = vmul.f32 %v124, %v213
    %v238 = vmul.f32 %v125, %v214
    %v239 = vmul.f32 %v126, %v215
    %v240 = vmul.f32 %v127, %v216
    %v241 = vmul.f32 %v128, %v217
    %v242 = vmul.f32 %v129, %v218
    %v243 = vmul.f32 %v130, %v219
    %v244 = vmul.f32 %v131, %v220
    %v245 = vmul.f32 %v132, %v221
    %v246 = vmul.f32 %v133, %v222
    %v247 = vmul.f32 %v134, %v223
    %v248 = vadd.f32 %v87, %v224
    %v249 = vadd.f32 %v88, %v225
    %v250 = vadd.f32 %v89, %v226
    %v251 = vadd.f32 %v90, %v227
    %v252 = vadd.f32 %v91, %v228
    %v253 = vadd.f32 %v92, %v229
    %v254 = vadd.f32 %v93, %v230
    %v255 = vadd.f32 %v94, %v231
    %v256 = vadd.f32 %v95, %v232
    %v257 = vadd.f32 %v96, %v233
    %v258 = vadd.f32 %v97, %v234
    %v259 = vadd.f32 %v98, %v235
    %v260 = vadd.f32 %v99, %v236
    %v261 = vadd.f32 %v100, %v237
    %v262 = vadd.f32 %v101, %v238
    %v263 = vadd.f32 %v102, %v239
    %v264 = vadd.f32 %v103, %v240
    %v265 = vadd.f32 %v104, %v241
    %v266 = vadd.f32 %v105, %v242
    %v267 = vadd.f32 %v106, %v243
    %v268 = vadd.f32 %v107, %v244
    %v269 = vadd.f32 %v108, %v245
    %v270 = vadd.f32 %v109, %v246
    %v271 = vadd.f32 %v110, %v247
    %v272 = vld [vmem:[%s3] sm:$0x7]
    %v273 = vld [vmem:[%s4] sm:$0x7]
    %v274 = vmul.f32 %v273, %v143
    %v275 = vadd.f32 %v272, %v274
    %v276 = vld [vmem:[%s0] sm:$0x3]
    %v277 = vpack.c.bf16 %v276, %v276
    %v278 = vpack.c.bf16 %v251, %v248
    %v279 = vpack.c.bf16 %v252, %v249
    %v280 = vpack.c.bf16 %v253, %v250
    %v281 = vpack.c.bf16 %v257, %v254
    %v282 = vpack.c.bf16 %v258, %v255
    %v283 = vpack.c.bf16 %v259, %v256
    %v284 = vpack.c.bf16 %v263, %v260
    %v285 = vpack.c.bf16 %v264, %v261
    %v286 = vpack.c.bf16 %v265, %v262
    %v287 = vpack.c.bf16 %v269, %v266
    %v288 = vpack.c.bf16 %v270, %v267
    %v289 = vpack.c.bf16 %v271, %v268
    %v291 = vlaneseq
    %v292 = vshrl.u32 %v291, 7
    %v293 = vsub.s32 0, %v292
    %v294 = vrot.slane %v275, %v293
    %v295 = vlaneseq
    %v296 = vshrl.u32 %v295, 7
    %v297 = vsub.s32 1, %v296
    %v298 = vrot.slane %v275, %v297
    %v299 = vlaneseq
    %v300 = vshrl.u32 %v299, 7
    %v301 = vsub.s32 2, %v300
    %v302 = vrot.slane %v275, %v301
    %vm306 = vcmask 523264
    %v308 = vsel %vm306, %v277, 0
    %310 = vmatprep.subr.bf16.mxu0 %v279
    %311 = vmatpush1.bf16.msra.mxu0 %v278
    %312 = vmatprep.subr.bf16.mxu0 %v282
    %313 = vmatpush1.bf16.msra.mxu0 %v281
    %314 = vmatprep.subr.bf16.mxu0 %v285
    %315 = vmatpush1.bf16.msra.mxu0 %v284
    %316 = vmatprep.subr.bf16.mxu0 %v288
    %317 = vmatpush1.bf16.msra.mxu0 %v287
    %318 = vmatprep.subr.bf16.mxu0 0
    %319 = vmatpush1.bf16.msra.mxu0 0
    %320 = vmatprep.subr.bf16.mxu0 0
    %321 = vmatpush1.bf16.msra.mxu0 0
    %322 = vmatprep.subr.bf16.mxu0 0
    %323 = vmatpush1.bf16.msra.mxu0 0
    %324 = vmatprep.subr.bf16.mxu0 0
    %325 = vmatpush1.bf16.msra.mxu0 0
    %326 = vmatprep.subr.bf16.mxu0 0
    %327 = vmatpush1.bf16.msra.mxu0 0
    %328 = vmatprep.subr.bf16.mxu0 0
    %329 = vmatpush1.bf16.msra.mxu0 0
    %330 = vmatprep.subr.bf16.mxu0 0
    %331 = vmatpush1.bf16.msra.mxu0 0
    %332 = vmatprep.subr.bf16.mxu0 0
    %333 = vmatpush1.bf16.msra.mxu0 0
    %334 = vmatprep.subr.bf16.mxu0 0
    %335 = vmatpush1.bf16.msra.mxu0 0
    %336 = vmatprep.subr.bf16.mxu0 0
    %337 = vmatpush1.bf16.msra.mxu0 0
    %338 = vmatprep.subr.bf16.mxu0 0
    %339 = vmatpush1.bf16.msra.mxu0 0
    %340 = vmatprep.subr.bf16.mxu0 0
    %341 = vmatpush1.bf16.msra.mxu0 0
    %342 = vmatprep.mubr.bf16.mxu0 0
    %343 = vmatmul.mubr.bf16.gmra.mrb[0].mxu0 %v308
    %v344 = vpop.f32.mrb[0].mxu0
    %v345 = vadd.f32 %v294, %v344
    %v346 = vpop.f32.mrb[0].mxu0
    %v347 = vadd.f32 %v298, %v346
    %v348 = vpop.f32.mrb[0].mxu0
    %v349 = vpop.f32.mrb[0].mxu0
    %350 = vdwg.mxu0
    %351 = vmatprep.subr.bf16.mxu0 0
    %352 = vmatpush1.bf16.msra.mxu0 %v280
    %353 = vmatprep.subr.bf16.mxu0 0
    %354 = vmatpush1.bf16.msra.mxu0 %v283
    %355 = vmatprep.subr.bf16.mxu0 0
    %356 = vmatpush1.bf16.msra.mxu0 %v286
    %357 = vmatprep.subr.bf16.mxu0 0
    %358 = vmatpush1.bf16.msra.mxu0 %v289
    %359 = vmatprep.subr.bf16.mxu0 0
    %360 = vmatpush1.bf16.msra.mxu0 0
    %361 = vmatprep.subr.bf16.mxu0 0
    %362 = vmatpush1.bf16.msra.mxu0 0
    %363 = vmatprep.subr.bf16.mxu0 0
    %364 = vmatpush1.bf16.msra.mxu0 0
    %365 = vmatprep.subr.bf16.mxu0 0
    %366 = vmatpush1.bf16.msra.mxu0 0
    %367 = vmatprep.subr.bf16.mxu0 0
    %368 = vmatpush1.bf16.msra.mxu0 0
    %369 = vmatprep.subr.bf16.mxu0 0
    %370 = vmatpush1.bf16.msra.mxu0 0
    %371 = vmatprep.subr.bf16.mxu0 0
    %372 = vmatpush1.bf16.msra.mxu0 0
    %373 = vmatprep.subr.bf16.mxu0 0
    %374 = vmatpush1.bf16.msra.mxu0 0
    %375 = vmatprep.subr.bf16.mxu0 0
    %376 = vmatpush1.bf16.msra.mxu0 0
    %377 = vmatprep.subr.bf16.mxu0 0
    %378 = vmatpush1.bf16.msra.mxu0 0
    %379 = vmatprep.subr.bf16.mxu0 0
    %380 = vmatpush1.bf16.msra.mxu0 0
    %381 = vmatprep.subr.bf16.mxu0 0
    %382 = vmatpush1.bf16.msra.mxu0 0
    %383 = vmatprep.mubr.bf16.mxu0 0
    %384 = vmatmul.mubr.bf16.gmra.mrb[0].mxu0 %v308
    %v385 = vpop.f32.mrb[0].mxu0
    %v386 = vadd.f32 %v302, %v385
    %v387 = vpop.f32.mrb[0].mxu0
    %v388 = vpop.f32.mrb[0].mxu0
    %v389 = vpop.f32.mrb[0].mxu0
    %390 = vdwg.mxu0
    %v391 = vmax.f32 %v345, 0.0
    %v392 = vmax.f32 %v347, 0.0
    %v393 = vmax.f32 %v386, 0.0
    %v394 = vld [vmem:[%s7] sm:$0xff]
    %v395 = vld [vmem:[%s7 + $0x8] sm:$0xff]
    %v396 = vld [vmem:[%s7 + $0x10] sm:$0xff]
    %v397 = vld [vmem:[%s7 + $0x18] sm:$0xff]
    %v398 = vld [vmem:[%s7 + $0x20] sm:$0xff]
    %v399 = vld [vmem:[%s7 + $0x28] sm:$0xff]
    %v400 = vld [vmem:[%s7 + $0x30] sm:$0xff]
    %v401 = vld [vmem:[%s7 + $0x38] sm:$0xff]
    %v402 = vld [vmem:[%s7 + $0x40] sm:$0xff]
    %v403 = vld [vmem:[%s7 + $0x48] sm:$0xff]
    %v404 = vld [vmem:[%s7 + $0x50] sm:$0xff]
    %v405 = vld [vmem:[%s7 + $0x58] sm:$0xff]
    %v406 = vld [vmem:[%s7 + $0x60] sm:$0xff]
    %v407 = vld [vmem:[%s7 + $0x68] sm:$0xff]
    %v408 = vld [vmem:[%s7 + $0x70] sm:$0xff]
    %v409 = vld [vmem:[%s7 + $0x78] sm:$0xff]
    %v410 = vld [vmem:[%s7 + $0x80] sm:$0xff]
    %v411 = vld [vmem:[%s7 + $0x88] sm:$0xff]
    %v412 = vld [vmem:[%s7 + $0x90] sm:$0xff]
    %v413 = vld [vmem:[%s7 + $0x98] sm:$0xff]
    %v414 = vld [vmem:[%s7 + $0xa0] sm:$0xff]
    %v415 = vld [vmem:[%s7 + $0xa8] sm:$0xff]
    %v416 = vld [vmem:[%s7 + $0xb0] sm:$0xff]
    %v417 = vld [vmem:[%s7 + $0xb8] sm:$0xff]
    %v418 = vld [vmem:[%s7 + $0xc0] sm:$0xff]
    %v419 = vld [vmem:[%s7 + $0xc8] sm:$0xff]
    %v420 = vld [vmem:[%s7 + $0xd0] sm:$0xff]
    %v421 = vld [vmem:[%s7 + $0xd8] sm:$0xff]
    %v422 = vld [vmem:[%s7 + $0xe0] sm:$0xff]
    %v423 = vld [vmem:[%s7 + $0xe8] sm:$0xff]
    %v424 = vld [vmem:[%s7 + $0xf0] sm:$0xff]
    %v425 = vld [vmem:[%s7 + $0xf8] sm:$0xff]
    %v426 = vld [vmem:[%s7 + $0x100] sm:$0xff]
    %v427 = vld [vmem:[%s7 + $0x108] sm:$0xff]
    %v428 = vld [vmem:[%s7 + $0x110] sm:$0xff]
    %v429 = vld [vmem:[%s7 + $0x118] sm:$0xff]
    %v430 = vld [vmem:[%s7 + $0x120] sm:$0xff]
    %v431 = vld [vmem:[%s7 + $0x128] sm:$0xff]
    %v432 = vld [vmem:[%s7 + $0x130] sm:$0xff]
    %v433 = vld [vmem:[%s7 + $0x138] sm:$0xff]
    %v434 = vld [vmem:[#allocation7] sm:$0xff]
    %v435 = vld [vmem:[#allocation7 + $0x8] sm:$0xff]
    %v436 = vld [vmem:[#allocation7 + $0x10] sm:$0xff]
    %v437 = vld [vmem:[#allocation7 + $0x18] sm:$0xff]
    %v438 = vld [vmem:[#allocation7 + $0x20] sm:$0xff]
    %v439 = vld [vmem:[#allocation7 + $0x28] sm:$0xff]
    %v440 = vld [vmem:[#allocation7 + $0x30] sm:$0xff]
    %v441 = vld [vmem:[#allocation7 + $0x38] sm:$0xff]
    %v442 = vld [vmem:[#allocation7 + $0x40] sm:$0xff]
    %v443 = vld [vmem:[#allocation7 + $0x48] sm:$0xff]
    %v444 = vld [vmem:[#allocation7 + $0x50] sm:$0xff]
    %v445 = vld [vmem:[#allocation7 + $0x58] sm:$0xff]
    %v446 = vld [vmem:[#allocation7 + $0x60] sm:$0xff]
    %v447 = vld [vmem:[#allocation7 + $0x68] sm:$0xff]
    %v448 = vld [vmem:[#allocation7 + $0x70] sm:$0xff]
    %v449 = vld [vmem:[#allocation7 + $0x78] sm:$0xff]
    %v450 = vld [vmem:[#allocation7 + $0x80] sm:$0xff]
    %v451 = vld [vmem:[#allocation7 + $0x88] sm:$0xff]
    %v452 = vld [vmem:[#allocation7 + $0x90] sm:$0xff]
    %v453 = vld [vmem:[#allocation7 + $0x98] sm:$0xff]
    %v454 = vld [vmem:[#allocation7 + $0xa0] sm:$0xff]
    %v455 = vld [vmem:[#allocation7 + $0xa8] sm:$0xff]
    %v456 = vld [vmem:[#allocation7 + $0xb0] sm:$0xff]
    %v457 = vld [vmem:[#allocation7 + $0xb8] sm:$0xff]
    %v458 = vld [vmem:[#allocation7 + $0xc0] sm:$0xff]
    %v459 = vld [vmem:[#allocation7 + $0xc8] sm:$0xff]
    %v460 = vld [vmem:[#allocation7 + $0xd0] sm:$0xff]
    %v461 = vld [vmem:[#allocation7 + $0xd8] sm:$0xff]
    %v462 = vld [vmem:[#allocation7 + $0xe0] sm:$0xff]
    %v463 = vld [vmem:[#allocation7 + $0xe8] sm:$0xff]
    %v464 = vld [vmem:[#allocation7 + $0xf0] sm:$0xff]
    %v465 = vld [vmem:[#allocation7 + $0xf8] sm:$0xff]
    %v466 = vld [vmem:[#allocation7 + $0x100] sm:$0xff]
    %v467 = vld [vmem:[#allocation7 + $0x108] sm:$0xff]
    %v468 = vld [vmem:[#allocation7 + $0x110] sm:$0xff]
    %v469 = vld [vmem:[#allocation7 + $0x118] sm:$0xff]
    %v470 = vld [vmem:[#allocation7 + $0x120] sm:$0xff]
    %v471 = vld [vmem:[#allocation7 + $0x128] sm:$0xff]
    %v472 = vld [vmem:[#allocation7 + $0x130] sm:$0xff]
    %v473 = vld [vmem:[#allocation7 + $0x138] sm:$0xff]
    %v474 = vld [vmem:[%s11] sm:$0xff]
    %v475 = vld [vmem:[%s11 + $0x8] sm:$0xff]
    %v476 = vld [vmem:[%s11 + $0x10] sm:$0xff]
    %v477 = vld [vmem:[%s11 + $0x18] sm:$0xff]
    %v478 = vld [vmem:[%s11 + $0x20] sm:$0xff]
    %v479 = vld [vmem:[%s11 + $0x28] sm:$0xff]
    %v480 = vld [vmem:[%s11 + $0x30] sm:$0xff]
    %v481 = vld [vmem:[%s11 + $0x38] sm:$0xff]
    %v482 = vld [vmem:[%s11 + $0x40] sm:$0xff]
    %v483 = vld [vmem:[%s11 + $0x48] sm:$0xff]
    %v484 = vld [vmem:[%s11 + $0x50] sm:$0xff]
    %v485 = vld [vmem:[%s11 + $0x58] sm:$0xff]
    %v486 = vld [vmem:[%s11 + $0x60] sm:$0xff]
    %v487 = vld [vmem:[%s11 + $0x68] sm:$0xff]
    %v488 = vld [vmem:[%s11 + $0x70] sm:$0xff]
    %v489 = vld [vmem:[%s11 + $0x78] sm:$0xff]
    %v490 = vld [vmem:[%s11 + $0x80] sm:$0xff]
    %v491 = vld [vmem:[%s11 + $0x88] sm:$0xff]
    %v492 = vld [vmem:[%s11 + $0x90] sm:$0xff]
    %v493 = vld [vmem:[%s11 + $0x98] sm:$0xff]
    %v494 = vld [vmem:[%s11 + $0xa0] sm:$0xff]
    %v495 = vld [vmem:[%s11 + $0xa8] sm:$0xff]
    %v496 = vld [vmem:[%s11 + $0xb0] sm:$0xff]
    %v497 = vld [vmem:[%s11 + $0xb8] sm:$0xff]
    %v498 = vld [vmem:[%s11 + $0xc0] sm:$0xff]
    %v499 = vld [vmem:[%s11 + $0xc8] sm:$0xff]
    %v500 = vld [vmem:[%s11 + $0xd0] sm:$0xff]
    %v501 = vld [vmem:[%s11 + $0xd8] sm:$0xff]
    %v502 = vld [vmem:[%s11 + $0xe0] sm:$0xff]
    %v503 = vld [vmem:[%s11 + $0xe8] sm:$0xff]
    %v504 = vld [vmem:[%s11 + $0xf0] sm:$0xff]
    %v505 = vld [vmem:[%s11 + $0xf8] sm:$0xff]
    %v506 = vld [vmem:[%s11 + $0x100] sm:$0xff]
    %v507 = vld [vmem:[%s11 + $0x108] sm:$0xff]
    %v508 = vld [vmem:[%s11 + $0x110] sm:$0xff]
    %v509 = vld [vmem:[%s11 + $0x118] sm:$0xff]
    %v510 = vld [vmem:[%s11 + $0x120] sm:$0xff]
    %v511 = vld [vmem:[%s11 + $0x128] sm:$0xff]
    %v512 = vld [vmem:[%s11 + $0x130] sm:$0xff]
    %v513 = vld [vmem:[%s11 + $0x138] sm:$0xff]
    %v514 = vld [vmem:[%s12] sm:$0x1]
    %516 = vset.pattern.permute.xlu0 0
    %517 = vperm.xlu0 %516, %v474
    %v518 = vpop.permute.xlu0 %517
    %521 = vset.pattern.permute.xlu0 0
    %522 = vperm.xlu0 %521, %v475
    %v523 = vpop.permute.xlu0 %522
    %526 = vset.pattern.permute.xlu0 0
    %527 = vperm.xlu0 %526, %v476
    %v528 = vpop.permute.xlu0 %527
    %531 = vset.pattern.permute.xlu0 0
    %532 = vperm.xlu0 %531, %v477
    %v533 = vpop.permute.xlu0 %532
    %536 = vset.pattern.permute.xlu0 0
    %537 = vperm.xlu0 %536, %v478
    %v538 = vpop.permute.xlu0 %537
    %541 = vset.pattern.permute.xlu0 0
    %542 = vperm.xlu0 %541, %v479
    %v543 = vpop.permute.xlu0 %542
    %546 = vset.pattern.permute.xlu0 0
    %547 = vperm.xlu0 %546, %v480
    %v548 = vpop.permute.xlu0 %547
    %551 = vset.pattern.permute.xlu0 0
    %552 = vperm.xlu0 %551, %v481
    %v553 = vpop.permute.xlu0 %552
    %556 = vset.pattern.permute.xlu0 0
    %557 = vperm.xlu0 %556, %v482
    %v558 = vpop.permute.xlu0 %557
    %561 = vset.pattern.permute.xlu0 0
    %562 = vperm.xlu0 %561, %v483
    %v563 = vpop.permute.xlu0 %562
    %566 = vset.pattern.permute.xlu0 0
    %567 = vperm.xlu0 %566, %v484
    %v568 = vpop.permute.xlu0 %567
    %571 = vset.pattern.permute.xlu0 0
    %572 = vperm.xlu0 %571, %v485
    %v573 = vpop.permute.xlu0 %572
    %576 = vset.pattern.permute.xlu0 0
    %577 = vperm.xlu0 %576, %v486
    %v578 = vpop.permute.xlu0 %577
    %581 = vset.pattern.permute.xlu0 0
    %582 = vperm.xlu0 %581, %v487
    %v583 = vpop.permute.xlu0 %582
    %586 = vset.pattern.permute.xlu0 0
    %587 = vperm.xlu0 %586, %v488
    %v588 = vpop.permute.xlu0 %587
    %591 = vset.pattern.permute.xlu0 0
    %592 = vperm.xlu0 %591, %v489
    %v593 = vpop.permute.xlu0 %592
    %596 = vset.pattern.permute.xlu0 0
    %597 = vperm.xlu0 %596, %v490
    %v598 = vpop.permute.xlu0 %597
    %601 = vset.pattern.permute.xlu0 0
    %602 = vperm.xlu0 %601, %v491
    %v603 = vpop.permute.xlu0 %602
    %606 = vset.pattern.permute.xlu0 0
    %607 = vperm.xlu0 %606, %v492
    %v608 = vpop.permute.xlu0 %607
    %611 = vset.pattern.permute.xlu0 0
    %612 = vperm.xlu0 %611, %v493
    %v613 = vpop.permute.xlu0 %612
    %616 = vset.pattern.permute.xlu0 0
    %617 = vperm.xlu0 %616, %v494
    %v618 = vpop.permute.xlu0 %617
    %621 = vset.pattern.permute.xlu0 0
    %622 = vperm.xlu0 %621, %v495
    %v623 = vpop.permute.xlu0 %622
    %626 = vset.pattern.permute.xlu0 0
    %627 = vperm.xlu0 %626, %v496
    %v628 = vpop.permute.xlu0 %627
    %631 = vset.pattern.permute.xlu0 0
    %632 = vperm.xlu0 %631, %v497
    %v633 = vpop.permute.xlu0 %632
    %636 = vset.pattern.permute.xlu0 0
    %637 = vperm.xlu0 %636, %v498
    %v638 = vpop.permute.xlu0 %637
    %641 = vset.pattern.permute.xlu0 0
    %642 = vperm.xlu0 %641, %v499
    %v643 = vpop.permute.xlu0 %642
    %646 = vset.pattern.permute.xlu0 0
    %647 = vperm.xlu0 %646, %v500
    %v648 = vpop.permute.xlu0 %647
    %651 = vset.pattern.permute.xlu0 0
    %652 = vperm.xlu0 %651, %v501
    %v653 = vpop.permute.xlu0 %652
    %656 = vset.pattern.permute.xlu0 0
    %657 = vperm.xlu0 %656, %v502
    %v658 = vpop.permute.xlu0 %657
    %661 = vset.pattern.permute.xlu0 0
    %662 = vperm.xlu0 %661, %v503
    %v663 = vpop.permute.xlu0 %662
    %666 = vset.pattern.permute.xlu0 0
    %667 = vperm.xlu0 %666, %v504
    %v668 = vpop.permute.xlu0 %667
    %671 = vset.pattern.permute.xlu0 0
    %672 = vperm.xlu0 %671, %v505
    %v673 = vpop.permute.xlu0 %672
    %676 = vset.pattern.permute.xlu0 0
    %677 = vperm.xlu0 %676, %v506
    %v678 = vpop.permute.xlu0 %677
    %681 = vset.pattern.permute.xlu0 0
    %682 = vperm.xlu0 %681, %v507
    %v683 = vpop.permute.xlu0 %682
    %686 = vset.pattern.permute.xlu0 0
    %687 = vperm.xlu0 %686, %v508
    %v688 = vpop.permute.xlu0 %687
    %691 = vset.pattern.permute.xlu0 0
    %692 = vperm.xlu0 %691, %v509
    %v693 = vpop.permute.xlu0 %692
    %696 = vset.pattern.permute.xlu0 0
    %697 = vperm.xlu0 %696, %v510
    %v698 = vpop.permute.xlu0 %697
    %701 = vset.pattern.permute.xlu0 0
    %702 = vperm.xlu0 %701, %v511
    %v703 = vpop.permute.xlu0 %702
    %706 = vset.pattern.permute.xlu0 0
    %707 = vperm.xlu0 %706, %v512
    %v708 = vpop.permute.xlu0 %707
    %711 = vset.pattern.permute.xlu0 0
    %712 = vperm.xlu0 %711, %v513
    %v713 = vpop.permute.xlu0 %712
    %v716 = vlaneseq
    %v717 = vshrl.u32 %v716, 7
    %v718 = vsub.s32 0, %v717
    %v719 = vrot.slane %v514, %v718
    %v721 = vmul.f32 %v518, %v719
    %v722 = vmul.f32 %v523, %v719
    %v723 = vmul.f32 %v528, %v719
    %v724 = vmul.f32 %v533, %v719
    %v725 = vmul.f32 %v538, %v719
    %v726 = vmul.f32 %v543, %v719
    %v727 = vmul.f32 %v548, %v719
    %v728 = vmul.f32 %v553, %v719
    %v729 = vmul.f32 %v558, %v719
    %v730 = vmul.f32 %v563, %v719
    %v731 = vmul.f32 %v568, %v719
    %v732 = vmul.f32 %v573, %v719
    %v733 = vmul.f32 %v578, %v719
    %v734 = vmul.f32 %v583, %v719
    %v735 = vmul.f32 %v588, %v719
    %v736 = vmul.f32 %v593, %v719
    %v737 = vmul.f32 %v598, %v719
    %v738 = vmul.f32 %v603, %v719
    %v739 = vmul.f32 %v608, %v719
    %v740 = vmul.f32 %v613, %v719
    %v741 = vmul.f32 %v618, %v719
    %v742 = vmul.f32 %v623, %v719
    %v743 = vmul.f32 %v628, %v719
    %v744 = vmul.f32 %v633, %v719
    %v745 = vmul.f32 %v638, %v719
    %v746 = vmul.f32 %v643, %v719
    %v747 = vmul.f32 %v648, %v719
    %v748 = vmul.f32 %v653, %v719
    %v749 = vmul.f32 %v658, %v719
    %v750 = vmul.f32 %v663, %v719
    %v751 = vmul.f32 %v668, %v719
    %v752 = vmul.f32 %v673, %v719
    %v753 = vmul.f32 %v678, %v719
    %v754 = vmul.f32 %v683, %v719
    %v755 = vmul.f32 %v688, %v719
    %v756 = vmul.f32 %v693, %v719
    %v757 = vmul.f32 %v698, %v719
    %v758 = vmul.f32 %v703, %v719
    %v759 = vmul.f32 %v708, %v719
    %v760 = vmul.f32 %v713, %v719
    %v761 = vmul.f32 %v434, %v721
    %v762 = vmul.f32 %v435, %v722
    %v763 = vmul.f32 %v436, %v723
    %v764 = vmul.f32 %v437, %v724
    %v765 = vmul.f32 %v438, %v725
    %v766 = vmul.f32 %v439, %v726
    %v767 = vmul.f32 %v440, %v727
    %v768 = vmul.f32 %v441, %v728
    %v769 = vmul.f32 %v442, %v729
    %v770 = vmul.f32 %v443, %v730
    %v771 = vmul.f32 %v444, %v731
    %v772 = vmul.f32 %v445, %v732
    %v773 = vmul.f32 %v446, %v733
    %v774 = vmul.f32 %v447, %v734
    %v775 = vmul.f32 %v448, %v735
    %v776 = vmul.f32 %v449, %v736
    %v777 = vmul.f32 %v450, %v737
    %v778 = vmul.f32 %v451, %v738
    %v779 = vmul.f32 %v452, %v739
    %v780 = vmul.f32 %v453, %v740
    %v781 = vmul.f32 %v454, %v741
    %v782 = vmul.f32 %v455, %v742
    %v783 = vmul.f32 %v456, %v743
    %v784 = vmul.f32 %v457, %v744
    %v785 = vmul.f32 %v458, %v745
    %v786 = vmul.f32 %v459, %v746
    %v787 = vmul.f32 %v460, %v747
    %v788 = vmul.f32 %v461, %v748
    %v789 = vmul.f32 %v462, %v749
    %v790 = vmul.f32 %v463, %v750
    %v791 = vmul.f32 %v464, %v751
    %v792 = vmul.f32 %v465, %v752
    %v793 = vmul.f32 %v466, %v753
    %v794 = vmul.f32 %v467, %v754
    %v795 = vmul.f32 %v468, %v755
    %v796 = vmul.f32 %v469, %v756
    %v797 = vmul.f32 %v470, %v757
    %v798 = vmul.f32 %v471, %v758
    %v799 = vmul.f32 %v472, %v759
    %v800 = vmul.f32 %v473, %v760
    %v801 = vadd.f32 %v394, %v761
    %v802 = vadd.f32 %v395, %v762
    %v803 = vadd.f32 %v396, %v763
    %v804 = vadd.f32 %v397, %v764
    %v805 = vadd.f32 %v398, %v765
    %v806 = vadd.f32 %v399, %v766
    %v807 = vadd.f32 %v400, %v767
    %v808 = vadd.f32 %v401, %v768
    %v809 = vadd.f32 %v402, %v769
    %v810 = vadd.f32 %v403, %v770
    %v811 = vadd.f32 %v404, %v771
    %v812 = vadd.f32 %v405, %v772
    %v813 = vadd.f32 %v406, %v773
    %v814 = vadd.f32 %v407, %v774
    %v815 = vadd.f32 %v408, %v775
    %v816 = vadd.f32 %v409, %v776
    %v817 = vadd.f32 %v410, %v777
    %v818 = vadd.f32 %v411, %v778
    %v819 = vadd.f32 %v412, %v779
    %v820 = vadd.f32 %v413, %v780
    %v821 = vadd.f32 %v414, %v781
    %v822 = vadd.f32 %v415, %v782
    %v823 = vadd.f32 %v416, %v783
    %v824 = vadd.f32 %v417, %v784
    %v825 = vadd.f32 %v418, %v785
    %v826 = vadd.f32 %v419, %v786
    %v827 = vadd.f32 %v420, %v787
    %v828 = vadd.f32 %v421, %v788
    %v829 = vadd.f32 %v422, %v789
    %v830 = vadd.f32 %v423, %v790
    %v831 = vadd.f32 %v424, %v791
    %v832 = vadd.f32 %v425, %v792
    %v833 = vadd.f32 %v426, %v793
    %v834 = vadd.f32 %v427, %v794
    %v835 = vadd.f32 %v428, %v795
    %v836 = vadd.f32 %v429, %v796
    %v837 = vadd.f32 %v430, %v797
    %v838 = vadd.f32 %v431, %v798
    %v839 = vadd.f32 %v432, %v799
    %v840 = vadd.f32 %v433, %v800
    %v841 = vld [vmem:[%s9] sm:$0x1]
    %v842 = vld [vmem:[%s10] sm:$0x1]
    %v843 = vmul.f32 %v842, %v514
    %v844 = vadd.f32 %v841, %v843
    %v845 = vpack.c.bf16 %v391, %v391
    %v846 = vpack.c.bf16 %v392, %v392
    %v847 = vpack.c.bf16 %v393, %v393
    %v848 = vpack.c.bf16 %v802, %v801
    %v849 = vpack.c.bf16 %v804, %v803
    %v850 = vpack.c.bf16 %v806, %v805
    %v851 = vpack.c.bf16 %v808, %v807
    %v852 = vpack.c.bf16 %v810, %v809
    %v853 = vpack.c.bf16 %v812, %v811
    %v854 = vpack.c.bf16 %v814, %v813
    %v855 = vpack.c.bf16 %v816, %v815
    %v856 = vpack.c.bf16 %v818, %v817
    %v857 = vpack.c.bf16 %v820, %v819
    %v858 = vpack.c.bf16 %v822, %v821
    %v859 = vpack.c.bf16 %v824, %v823
    %v860 = vpack.c.bf16 %v826, %v825
    %v861 = vpack.c.bf16 %v828, %v827
    %v862 = vpack.c.bf16 %v830, %v829
    %v863 = vpack.c.bf16 %v832, %v831
    %v864 = vpack.c.bf16 %v834, %v833
    %v865 = vpack.c.bf16 %v836, %v835
    %v866 = vpack.c.bf16 %v838, %v837
    %v867 = vpack.c.bf16 %v840, %v839
    %v869 = vlaneseq
    %v870 = vshrl.u32 %v869, 7
    %v871 = vsub.s32 0, %v870
    %v872 = vrot.slane %v844, %v871
    %v875 = vsel %vm306, %v847, 0
    %877 = vmatprep.subr.bf16.mxu0 0
    %878 = vmatpush1.bf16.msra.mxu0 %v848
    %879 = vmatprep.subr.bf16.mxu0 0
    %880 = vmatpush1.bf16.msra.mxu0 %v849
    %881 = vmatprep.subr.bf16.mxu0 0
    %882 = vmatpush1.bf16.msra.mxu0 %v850
    %883 = vmatprep.subr.bf16.mxu0 0
    %884 = vmatpush1.bf16.msra.mxu0 %v851
    %885 = vmatprep.subr.bf16.mxu0 0
    %886 = vmatpush1.bf16.msra.mxu0 %v852
    %887 = vmatprep.subr.bf16.mxu0 0
    %888 = vmatpush1.bf16.msra.mxu0 %v853
    %889 = vmatprep.subr.bf16.mxu0 0
    %890 = vmatpush1.bf16.msra.mxu0 %v854
    %891 = vmatprep.subr.bf16.mxu0 0
    %892 = vmatpush1.bf16.msra.mxu0 %v855
    %893 = vmatprep.subr.bf16.mxu0 0
    %894 = vmatpush1.bf16.msra.mxu0 %v856
    %895 = vmatprep.subr.bf16.mxu0 0
    %896 = vmatpush1.bf16.msra.mxu0 %v857
    %897 = vmatprep.subr.bf16.mxu0 0
    %898 = vmatpush1.bf16.msra.mxu0 %v858
    %899 = vmatprep.subr.bf16.mxu0 0
    %900 = vmatpush1.bf16.msra.mxu0 %v859
    %901 = vmatprep.subr.bf16.mxu0 0
    %902 = vmatpush1.bf16.msra.mxu0 %v860
    %903 = vmatprep.subr.bf16.mxu0 0
    %904 = vmatpush1.bf16.msra.mxu0 %v861
    %905 = vmatprep.subr.bf16.mxu0 0
    %906 = vmatpush1.bf16.msra.mxu0 %v862
    %907 = vmatprep.subr.bf16.mxu0 0
    %908 = vmatpush1.bf16.msra.mxu0 %v863
    %909 = vmatprep.mubr.bf16.mxu0 %v846
    %910 = vmatmul.mubr.bf16.gmra.mrb[0].mxu0 %v845
    %v911 = vpop.f32.mrb[0].mxu0
    %v912 = vadd.f32 %v872, %v911
    %v913 = vpop.f32.mrb[0].mxu0
    %v914 = vpop.f32.mrb[0].mxu0
    %v915 = vpop.f32.mrb[0].mxu0
    %916 = vdwg.mxu0
    %917 = vmatprep.subr.bf16.mxu0 0
    %918 = vmatpush1.bf16.msra.mxu0 %v864
    %919 = vmatprep.subr.bf16.mxu0 0
    %920 = vmatpush1.bf16.msra.mxu0 %v865
    %921 = vmatprep.subr.bf16.mxu0 0
    %922 = vmatpush1.bf16.msra.mxu0 %v866
    %923 = vmatprep.subr.bf16.mxu0 0
    %924 = vmatpush1.bf16.msra.mxu0 %v867
    %925 = vmatprep.subr.bf16.mxu0 0
    %926 = vmatpush1.bf16.msra.mxu0 0
    %927 = vmatprep.subr.bf16.mxu0 0
    %928 = vmatpush1.bf16.msra.mxu0 0
    %929 = vmatprep.subr.bf16.mxu0 0
    %930 = vmatpush1.bf16.msra.mxu0 0
    %931 = vmatprep.subr.bf16.mxu0 0
    %932 = vmatpush1.bf16.msra.mxu0 0
    %933 = vmatprep.subr.bf16.mxu0 0
    %934 = vmatpush1.bf16.msra.mxu0 0
    %935 = vmatprep.subr.bf16.mxu0 0
    %936 = vmatpush1.bf16.msra.mxu0 0
    %937 = vmatprep.subr.bf16.mxu0 0
    %938 = vmatpush1.bf16.msra.mxu0 0
    %939 = vmatprep.subr.bf16.mxu0 0
    %940 = vmatpush1.bf16.msra.mxu0 0
    %941 = vmatprep.subr.bf16.mxu0 0
    %942 = vmatpush1.bf16.msra.mxu0 0
    %943 = vmatprep.subr.bf16.mxu0 0
    %944 = vmatpush1.bf16.msra.mxu0 0
    %945 = vmatprep.subr.bf16.mxu0 0
    %946 = vmatpush1.bf16.msra.mxu0 0
    %947 = vmatprep.subr.bf16.mxu0 0
    %948 = vmatpush1.bf16.msra.mxu0 0
    %949 = vmatprep.mubr.bf16.mxu0 0
    %950 = vmatmul.mubr.bf16.gmra.mrb[0].mxu0 %v875
    %v951 = vpop.f32.mrb[0].mxu0
    %v952 = vadd.f32 %v912, %v951
    %v953 = vpop.f32.mrb[0].mxu0
    %v954 = vpop.f32.mrb[0].mxu0
    %v955 = vpop.f32.mrb[0].mxu0
    %956 = vdwg.mxu0
    %957 = vst [vmem:[#allocation8] sm:$0x3] %v952
    // Predicated region
    $region66: #{tpu_custom_call.1} parent=1 // pred_check
      _
    $region67: #{tpu_custom_call.1} parent=1 // pred_check_branch
      %959 = sbr.rel (0) target = $region69
    $region68: #{tpu_custom_call.1} parent=1 // pred_region
      %s961 = ssub.s32 32, 32
      %962 = vsyncadd [#allocation4], %s961
      %s964 = sshll.u32 [#allocation8], 4
      %s965 = int_to_ptr.vmem [resolvable:$true] %s964
      %967 = dma.vmem_to_hbm [thread:$0]  %s965, 32, %s13, [#allocation4]
    $region69: #{tpu_custom_call.1} parent=1 // pred_fallthru
      _
    // Predicated region
    $region70: #{tpu_custom_call.1} parent=1 // pred_check
      _
    $region71: #{tpu_custom_call.1} parent=1 // pred_check_branch
      %969 = sbr.rel (0) target = $region73
    $region72: #{tpu_custom_call.1} parent=1 // pred_region
      %970 = dma.done [#allocation4], 32
    $region73: #{tpu_custom_call.1} parent=1 // pred_fallthru
      _
    %971 = vsyncpa [#allocation3], 1
    %972 = vsyncpa [#allocation6], 1
    %973 = vsyncpa [#allocation4], 1

</llo_original>
